<compile_context>
chip_gen: v7x
topology: tpu7x:2x2x1
jax: 0.10.0
libtpu: 0.0.40
codegen_flags: <defaults>
</compile_context>

<pallas_src>
import functools

import jax
import jax.numpy as jnp
from jax.experimental import pallas as pl
from jax.experimental.pallas import tpu as pltpu


def _round_up(x, m):
    return ((x + m - 1) // m) * m


def _ntxent_kernel(zr_ref, zc_ref, loss_ref, denom_ref, pos_ref, *,
                   block_m, block_n, n_valid, n_padded, half, inv_temp):
    """One (TM, TN) tile of the 2B x 2B similarity matrix.

    zr_ref : (TM, Dp) rows of padded z        (query rows of this tile)
    zc_ref : (TN, Dp) rows of padded z        (key   cols of this tile)
    loss_ref : (TM, 1) per-row loss output    (written on last col step)
    denom_ref, pos_ref : (TM, 1) f32 VMEM accumulators (resident across cols)
    """
    i = pl.program_id(0)          # row-tile index
    j = pl.program_id(1)          # col-tile index (reduction axis)

    @pl.when(j == 0)
    def _():
        denom_ref[...] = jnp.zeros_like(denom_ref)
        pos_ref[...] = jnp.zeros_like(pos_ref)

    # (TM, TN) similarity tile: contract the feature dim of both operands
    # (equivalent to zr @ zc.T) on the MXU, accumulate in f32.
    sim = jax.lax.dot_general(
        zr_ref[...], zc_ref[...],
        dimension_numbers=(((1,), (1,)), ((), ())),
        preferred_element_type=jnp.float32,
    ) * inv_temp

    # Global row / column indices of this tile inside the (2B, 2B) matrix.
    row = i * block_m + jax.lax.broadcasted_iota(jnp.int32, (block_m, block_n), 0)
    col = j * block_n + jax.lax.broadcasted_iota(jnp.int32, (block_m, block_n), 1)

    diag = row == col

    # PyTorch zeroes the diagonal of sim *before* exp, so the diagonal still
    # contributes exp(0) = 1 to the row sum — replicate that exactly.
    contrib = jnp.exp(jnp.where(diag, 0.0, sim))
    if n_valid < n_padded:
        # Static: only pay for the padded-column mask when padding exists.
        contrib = jnp.where(col < n_valid, contrib, 0.0)
    denom_ref[...] += jnp.sum(contrib, axis=1, keepdims=True)

    # Positive pair for row r:  col r+B if r < B, else col r-B.
    pos_col = jnp.where(row < half, row + half, row - half)
    is_pos = col == pos_col
    if n_valid < n_padded:
        is_pos = is_pos & (col < n_valid)
    pos_ref[...] += jnp.sum(jnp.where(is_pos, sim, 0.0), axis=1, keepdims=True)

    @pl.when(j == pl.num_programs(1) - 1)
    def _():
        # loss_row = -log(exp(pos) / denom) = log(denom) - pos
        loss_ref[...] = jnp.log(denom_ref[...]) - pos_ref[...]


def ntxent_loss(z_i, z_j, temperature=0.5, block_rows=128):
    """NT-Xent loss (scalar), matching torch NTXentLoss.forward(z_i, z_j)."""
    assert z_i.shape == z_j.shape and z_i.ndim == 2
    B, D = z_i.shape
    N = 2 * B

    z = jnp.concatenate([z_i, z_j], axis=0).astype(jnp.float32)   # (2B, D)

    # (8, 128)-aligned padded shapes; zero padding in D leaves dot products
    # unchanged, padded rows/cols are masked out inside the kernel (only when
    # padding is actually present) or discarded by the wrapper.
    TM = min(block_rows, _round_up(N, 8))
    TN = TM
    Np = _round_up(N, TM)
    Dp = _round_up(D, 128)
    z_pad = jnp.pad(z, ((0, Np - N), (0, Dp - D)))

    grid = (Np // TM, Np // TN)

    kernel = functools.partial(
        _ntxent_kernel,
        block_m=TM, block_n=TN,
        n_valid=N, n_padded=Np, half=B,
        inv_temp=float(1.0 / temperature),
    )

    losses = pl.pallas_call(
        kernel,
        out_shape=jax.ShapeDtypeStruct((Np, 1), jnp.float32),
        grid_spec=pltpu.PrefetchScalarGridSpec(
            num_scalar_prefetch=0,
            grid=grid,
            in_specs=[
                pl.BlockSpec((TM, Dp), lambda i, j: (i, 0)),   # z rows (re-used across j)
                pl.BlockSpec((TN, Dp), lambda i, j: (j, 0)),   # z cols
            ],
            out_specs=pl.BlockSpec((TM, 1), lambda i, j: (i, 0)),
            scratch_shapes=[
                pltpu.VMEM((TM, 1), jnp.float32),   # denom accumulator
                pltpu.VMEM((TM, 1), jnp.float32),   # positive-pair accumulator
            ],
        ),
        compiler_params=pltpu.CompilerParams(
            dimension_semantics=("parallel", "arbitrary"),
        ),
        cost_estimate=pl.CostEstimate(
            flops=2 * Np * Np * Dp,
            transcendentals=Np * Np + Np,
            bytes_accessed=2 * Np * Dp * 4 + Np * 4,
        ),
    )(z_pad, z_pad)

    # Mean over the 2B valid rows (padded rows are discarded).
    return jnp.mean(losses[:N, 0])


def reference_ntxent(z_i, z_j, temperature=0.5):
    """Pure-JAX transcription of the PyTorch NTXentLoss.forward."""
    B = z_i.shape[0]
    z = jnp.concatenate([z_i, z_j], axis=0).astype(jnp.float32)
    sim = (z @ z.T) / temperature
    sim_i_j = jnp.diagonal(sim, offset=B)
    sim_j_i = jnp.diagonal(sim, offset=-B)
    positive = jnp.concatenate([sim_i_j, sim_j_i], axis=0)
    mask = 1.0 - jnp.eye(2 * B, dtype=jnp.float32)
    negative = jnp.exp(sim * mask).sum(axis=1)
    loss = -jnp.log(jnp.exp(positive) / negative)
    return loss.mean()


# TODO(synk): the full SimCLR pipeline feeds this loss with ResNet18 + projection
# head embeddings; the external encoder is out of scope here — this kernel
# implements exactly the NTXentLoss module (which takes embeddings z_i, z_j).


if __name__ == "__main__":
    key = jax.random.PRNGKey(0)
    ks = jax.random.split(key, 6)
    temperature = 0.5

    def _l2norm(v):
        return v / jnp.linalg.norm(v, axis=-1, keepdims=True)

    # Case 1: tiny, unaligned shapes (exercises padding + masking path).
    B0, D0 = 2, 64
    zi0 = _l2norm(jax.random.normal(ks[0], (B0, D0), jnp.float32))
    zj0 = _l2norm(jax.random.normal(ks[1], (B0, D0), jnp.float32))
    loss0 = jax.block_until_ready(ntxent_loss(zi0, zj0, temperature))
    ref0 = reference_ntxent(zi0, zj0, temperature)
    assert loss0.shape == ()
    assert jnp.allclose(loss0, ref0, atol=1e-4, rtol=1e-4), (loss0, ref0)

    # Case 2: (8,128)-aligned batch with a real 2x2 tile grid (N=256, TM=128),
    # no-padding fast path (column mask statically elided).
    B1, D1 = 128, 128
    zi1 = _l2norm(jax.random.normal(ks[2], (B1, D1), jnp.float32))
    zj1 = _l2norm(jax.random.normal(ks[3], (B1, D1), jnp.float32))
    loss1 = jax.block_until_ready(ntxent_loss(zi1, zj1, temperature))
    ref1 = reference_ntxent(zi1, zj1, temperature)
    assert jnp.allclose(loss1, ref1, atol=1e-4, rtol=1e-4), (loss1, ref1)

    # Case 3: multi-tile grid with row/col/feature padding (N=160 -> 256, D=96 -> 128).
    B2, D2 = 80, 96
    zi2 = _l2norm(jax.random.normal(ks[4], (B2, D2), jnp.float32))
    zj2 = _l2norm(jax.random.normal(ks[5], (B2, D2), jnp.float32))
    loss2 = jax.block_until_ready(ntxent_loss(zi2, zj2, temperature))
    ref2 = reference_ntxent(zi2, zj2, temperature)
    assert jnp.allclose(loss2, ref2, atol=1e-4, rtol=1e-4), (loss2, ref2)

    print("KERNEL_OK")
</pallas_src>

<mosaic_0001>
module attributes {stable_mosaic.version = 11 : i64} {
  func.func @_ntxent_kernel(%arg0: i32, %arg1: i32, %arg2: memref<8x128xf32, #tpu.memory_space<vmem>>, %arg3: memref<8x128xf32, #tpu.memory_space<vmem>>, %arg4: memref<8x1xf32, #tpu.memory_space<vmem>>, %arg5: memref<8x1xf32, #tpu.memory_space<vmem>>, %arg6: memref<8x1xf32, #tpu.memory_space<vmem>>) attributes {dimension_semantics = [#tpu.dimension_semantics<parallel>, #tpu.dimension_semantics<arbitrary>], iteration_bounds = array<i64: 1, 1>, scalar_prefetch = 0 : i64, scratch_operands = 2 : i64, tpu.core_type = #tpu.core_type<tc>, window_params = [{transform_indices = @transform_0, window_bounds = array<i64: 8, 128>}, {transform_indices = @transform_1, window_bounds = array<i64: 8, 128>}, {transform_indices = @transform_2, window_bounds = array<i64: 8, 1>}]} {
    %c0_i32 = arith.constant 0 : i32
    %0 = arith.cmpi eq, %arg1, %c0_i32 : i32
    %1 = arith.extui %0 : i1 to i32
    %c0_i32_0 = arith.constant 0 : i32
    %2 = arith.cmpi ne, %1, %c0_i32_0 : i32
    scf.if %2 {
      %cst_24 = arith.constant 0.000000e+00 : f32
      %50 = vector.broadcast %cst_24 : f32 to vector<8x1xf32>
      %c0_25 = arith.constant 0 : index
      %c0_26 = arith.constant 0 : index
      %51 = vector.load %arg5[%c0_25, %c0_26] : memref<8x1xf32, #tpu.memory_space<vmem>>, vector<8x1xf32>
      tpu.vector_store %arg5[%c0_25, %c0_26], %50 {strides = array<i32>} : memref<8x1xf32, #tpu.memory_space<vmem>>, vector<8x1xf32>,
      %cst_27 = arith.constant 0.000000e+00 : f32
      %52 = vector.broadcast %cst_27 : f32 to vector<8x1xf32>
      %c0_28 = arith.constant 0 : index
      %c0_29 = arith.constant 0 : index
      %53 = vector.load %arg6[%c0_28, %c0_29] : memref<8x1xf32, #tpu.memory_space<vmem>>, vector<8x1xf32>
      tpu.vector_store %arg6[%c0_28, %c0_29], %52 {strides = array<i32>} : memref<8x1xf32, #tpu.memory_space<vmem>>, vector<8x1xf32>,
    } else {
    }
    %c0 = arith.constant 0 : index
    %c0_1 = arith.constant 0 : index
    %3 = vector.load %arg2[%c0, %c0_1] : memref<8x128xf32, #tpu.memory_space<vmem>>, vector<8x128xf32>
    %c0_2 = arith.constant 0 : index
    %c0_3 = arith.constant 0 : index
    %4 = vector.load %arg3[%c0_2, %c0_3] : memref<8x128xf32, #tpu.memory_space<vmem>>, vector<8x128xf32>
    %cst = arith.constant dense<0.000000e+00> : vector<8x8xf32>
    %5 = tpu.matmul %3, %4, %cst {dimension_numbers = #tpu.dot_dimension_numbers<[1], [1], [0], [0], [0, 0, 1, 0], [], []>} : vector<8x128xf32>, vector<8x128xf32>, vector<8x8xf32> -> vector<8x8xf32>
    %cst_4 = arith.constant 2.000000e+00 : f32
    %6 = vector.broadcast %cst_4 : f32 to vector<8x8xf32>
    %7 = arith.mulf %5, %6 : vector<8x8xf32>
    %c8_i32 = arith.constant 8 : i32
    %8 = arith.muli %arg0, %c8_i32 : i32
    %9 = tpu.iota {dimensions = array<i32: 0>} : vector<8x8xi32>
    %10 = vector.broadcast %8 : i32 to vector<8x8xi32>
    %11 = arith.addi %10, %9 : vector<8x8xi32>
    %c8_i32_5 = arith.constant 8 : i32
    %12 = arith.muli %arg1, %c8_i32_5 : i32
    %13 = tpu.iota {dimensions = array<i32: 1>} : vector<8x8xi32>
    %14 = vector.broadcast %12 : i32 to vector<8x8xi32>
    %15 = arith.addi %14, %13 : vector<8x8xi32>
    %16 = arith.cmpi eq, %11, %15 : vector<8x8xi32>
    %cst_6 = arith.constant 0.000000e+00 : f32
    %17 = vector.broadcast %cst_6 : f32 to vector<8x8xf32>
    %18 = arith.select %16, %17, %7 : vector<8x8xi1>, vector<8x8xf32>
    %19 = math.exp %18 : vector<8x8xf32>
    %c4_i32 = arith.constant 4 : i32
    %20 = vector.broadcast %c4_i32 : i32 to vector<8x8xi32>
    %21 = arith.cmpi slt, %15, %20 : vector<8x8xi32>
    %cst_7 = arith.constant 0.000000e+00 : f32
    %22 = vector.broadcast %cst_7 : f32 to vector<8x8xf32>
    %23 = arith.select %21, %19, %22 : vector<8x8xi1>, vector<8x8xf32>
    %c0_8 = arith.constant 0 : index
    %c0_9 = arith.constant 0 : index
    %24 = vector.load %arg5[%c0_8, %c0_9] : memref<8x1xf32, #tpu.memory_space<vmem>>, vector<8x1xf32>
    %cst_10 = arith.constant dense<0.000000e+00> : vector<8xf32>
    %25 = vector.multi_reduction <add>, %23, %cst_10 [1] : vector<8x8xf32> to vector<8xf32>
    %26 = vector.shape_cast %25 : vector<8xf32> to vector<8x1xf32>
    %27 = arith.addf %24, %26 : vector<8x1xf32>
    %c0_11 = arith.constant 0 : index
    %c0_12 = arith.constant 0 : index
    %28 = vector.load %arg5[%c0_11, %c0_12] : memref<8x1xf32, #tpu.memory_space<vmem>>, vector<8x1xf32>
    tpu.vector_store %arg5[%c0_11, %c0_12], %27 {strides = array<i32>} : memref<8x1xf32, #tpu.memory_space<vmem>>, vector<8x1xf32>,
    %c2_i32 = arith.constant 2 : i32
    %29 = vector.broadcast %c2_i32 : i32 to vector<8x8xi32>
    %30 = arith.cmpi slt, %11, %29 : vector<8x8xi32>
    %c2_i32_13 = arith.constant 2 : i32
    %31 = vector.broadcast %c2_i32_13 : i32 to vector<8x8xi32>
    %32 = arith.addi %11, %31 : vector<8x8xi32>
    %c2_i32_14 = arith.constant 2 : i32
    %33 = vector.broadcast %c2_i32_14 : i32 to vector<8x8xi32>
    %34 = arith.subi %11, %33 : vector<8x8xi32>
    %35 = arith.select %30, %32, %34 : vector<8x8xi1>, vector<8x8xi32>
    %36 = arith.cmpi eq, %15, %35 : vector<8x8xi32>
    %c4_i32_15 = arith.constant 4 : i32
    %37 = vector.broadcast %c4_i32_15 : i32 to vector<8x8xi32>
    %38 = arith.cmpi slt, %15, %37 : vector<8x8xi32>
    %39 = arith.andi %36, %38 : vector<8x8xi1>
    %c0_16 = arith.constant 0 : index
    %c0_17 = arith.constant 0 : index
    %40 = vector.load %arg6[%c0_16, %c0_17] : memref<8x1xf32, #tpu.memory_space<vmem>>, vector<8x1xf32>
    %cst_18 = arith.constant 0.000000e+00 : f32
    %41 = vector.broadcast %cst_18 : f32 to vector<8x8xf32>
    %42 = arith.select %39, %7, %41 : vector<8x8xi1>, vector<8x8xf32>
    %cst_19 = arith.constant dense<0.000000e+00> : vector<8xf32>
    %43 = vector.multi_reduction <add>, %42, %cst_19 [1] : vector<8x8xf32> to vector<8xf32>
    %44 = vector.shape_cast %43 : vector<8xf32> to vector<8x1xf32>
    %45 = arith.addf %40, %44 : vector<8x1xf32>
    %c0_20 = arith.constant 0 : index
    %c0_21 = arith.constant 0 : index
    %46 = vector.load %arg6[%c0_20, %c0_21] : memref<8x1xf32, #tpu.memory_space<vmem>>, vector<8x1xf32>
    tpu.vector_store %arg6[%c0_20, %c0_21], %45 {strides = array<i32>} : memref<8x1xf32, #tpu.memory_space<vmem>>, vector<8x1xf32>,
    %c0_i32_22 = arith.constant 0 : i32
    %47 = arith.cmpi eq, %arg1, %c0_i32_22 : i32
    %48 = arith.extui %47 : i1 to i32
    %c0_i32_23 = arith.constant 0 : i32
    %49 = arith.cmpi ne, %48, %c0_i32_23 : i32
    scf.if %49 {
      %c0_24 = arith.constant 0 : index
      %c0_25 = arith.constant 0 : index
      %50 = vector.load %arg5[%c0_24, %c0_25] : memref<8x1xf32, #tpu.memory_space<vmem>>, vector<8x1xf32>
      %51 = math.log %50 : vector<8x1xf32>
      %c0_26 = arith.constant 0 : index
      %c0_27 = arith.constant 0 : index
      %52 = vector.load %arg6[%c0_26, %c0_27] : memref<8x1xf32, #tpu.memory_space<vmem>>, vector<8x1xf32>
      %53 = arith.subf %51, %52 : vector<8x1xf32>
      %c0_28 = arith.constant 0 : index
      %c0_29 = arith.constant 0 : index
      %54 = vector.load %arg4[%c0_28, %c0_29] : memref<8x1xf32, #tpu.memory_space<vmem>>, vector<8x1xf32>
      tpu.vector_store %arg4[%c0_28, %c0_29], %53 {strides = array<i32>} : memref<8x1xf32, #tpu.memory_space<vmem>>, vector<8x1xf32>,
    } else {
    }
    return
  }
  func.func @transform_0(%arg0: i32, %arg1: i32) -> (i32, i32) {
    %c0_i32 = arith.constant 0 : i32
    %c0_i32_0 = arith.constant 0 : i32
    return %arg0, %c0_i32 : i32, i32
  }
  func.func @transform_1(%arg0: i32, %arg1: i32) -> (i32, i32) {
    %c0_i32 = arith.constant 0 : i32
    %c0_i32_0 = arith.constant 0 : i32
    return %arg1, %c0_i32 : i32, i32
  }
  func.func @transform_2(%arg0: i32, %arg1: i32) -> (i32, i32) {
    %c0_i32 = arith.constant 0 : i32
    %c0_i32_0 = arith.constant 0 : i32
    return %arg0, %c0_i32 : i32, i32
  }
}

</mosaic_0001>

<llo_original>
// kernel: tpu_custom_call.1
$region0: #{tpu_custom_call.1}
  #allocation0 [shape = 'u32[]', space=smem, size = 0x4, offset = 0x4, fixed_abs, tag = 'smem constant byte address 0x4 - core index']
  #allocation1 [shape = 'u32[144,128]{1,0:T(1,128)}', space=vmem, size = 0x12000, scoped, tag = 'internal scratch']
  #allocation2 [shape = 'f32[8,1]{1,0:T(8,128)}', space=vmem, size = 0x1000, scoped, tag = 'scratch operand']
  #allocation3 [shape = 'f32[8,1]{1,0:T(8,128)}', space=vmem, size = 0x1000, scoped, tag = 'scratch operand']
  %s0 = inlined_call_operand.hbm [shape: f32[8,128], index: 0, kind: input, shape index: {}]
  %s1 = inlined_call_operand.hbm [shape: f32[8,128], index: 1, kind: input, shape index: {}]
  %s2 = inlined_call_operand.vmem [shape: f32[8,1], index: 2, kind: output, shape index: {}]
  %s3 = sld [smem:[#allocation0]]
  $region34: #{tpu_custom_call.1} parent=0
    _
  %s5 = ssub.s32 1, %s3
  %s6 = scalar_select 0, %s5, %s3
  $region1: #{tpu_custom_call.1} parent=0
    #allocation4 [shape = 'u8[4096]{0}', space=vmem, size = 0x1000, scoped, tag = 'input window, operand 0, single buffered']
    #allocation5 [shape = 's32[1]{0}', space=sflag, size = 0x4, scoped, tag = 'scoped memory for tpu_custom_call.1']
    #allocation6 [shape = 'u8[4096]{0}', space=vmem, size = 0x1000, scoped, tag = 'input window, operand 1, single buffered']
    #allocation7 [shape = 's32[1]{0}', space=sflag, size = 0x4, scoped, tag = 'scoped memory for tpu_custom_call.1']
    %7 = vsyncpa [#allocation5], 0
    %8 = vsyncpa [#allocation7], 0
    // Predicated region
    $region2: #{tpu_custom_call.1} parent=1 // pred_check
      _
    $region3: #{tpu_custom_call.1} parent=1 // pred_check_branch
      %10 = sbr.rel (0) target = $region5
    $region4: #{tpu_custom_call.1} parent=1 // pred_region
      %s12 = ssub.s32 128, 128
      %13 = vsyncadd [#allocation5], %s12
      %s15 = sshll.u32 [#allocation4], 4
      %s16 = int_to_ptr.vmem [resolvable:$true] %s15
      %18 = dma.hbm_to_vmem [thread:$0]  %s0, 128, %s16, [#allocation5]
    $region5: #{tpu_custom_call.1} parent=1 // pred_fallthru
      _
    // Predicated region
    $region6: #{tpu_custom_call.1} parent=1 // pred_check
      _
    $region7: #{tpu_custom_call.1} parent=1 // pred_check_branch
      %20 = sbr.rel (0) target = $region9
    $region8: #{tpu_custom_call.1} parent=1 // pred_region
      %s22 = ssub.s32 128, 128
      %23 = vsyncadd [#allocation7], %s22
      %s25 = sshll.u32 [#allocation6], 4
      %s26 = int_to_ptr.vmem [resolvable:$true] %s25
      %28 = dma.hbm_to_vmem [thread:$0]  %s1, 128, %s26, [#allocation7]
    $region9: #{tpu_custom_call.1} parent=1 // pred_fallthru
      _
    // Predicated region
    $region10: #{tpu_custom_call.1} parent=1 // pred_check
      _
    $region11: #{tpu_custom_call.1} parent=1 // pred_check_branch
      %30 = sbr.rel (0) target = $region13
    $region12: #{tpu_custom_call.1} parent=1 // pred_region
      %31 = dma.done [#allocation5], 128
    $region13: #{tpu_custom_call.1} parent=1 // pred_fallthru
      _
    // Predicated region
    $region14: #{tpu_custom_call.1} parent=1 // pred_check
      _
    $region15: #{tpu_custom_call.1} parent=1 // pred_check_branch
      %33 = sbr.rel (0) target = $region17
    $region16: #{tpu_custom_call.1} parent=1 // pred_region
      %34 = dma.done [#allocation7], 128
    $region17: #{tpu_custom_call.1} parent=1 // pred_fallthru
      _
    %p35 = scmp.eq.s32.totalorder 0, 0
    // Predicated region
    $region18: #{tpu_custom_call.1} parent=1 // pred_check
      %p36 = pneg %p35
    $region19: #{tpu_custom_call.1} parent=1 // pred_check_branch
      %38 = sbr.rel (%p36) target = $region21
    $region20: #{tpu_custom_call.1} parent=1 // pred_region
      %vm39 = vcmask 7168
      %40 = vst.msk [vmem:[#allocation2] sm:$0xff] %vm39, 0.0
      %41 = vst.msk [vmem:[#allocation3] sm:$0xff] %vm39, 0.0
    $region21: #{tpu_custom_call.1} parent=1 // pred_fallthru
      _
    %v42 = vld [vmem:[#allocation4] sm:$0xff]
    %v43 = vld [vmem:[#allocation6] sm:$0xff]
    %44 = vmatprep.subr.mxu0 0.0
    %45 = vmatpush1.xpose.msra.mxu0 %v43
    %46 = vmatprep.subr.mxu0 0.0
    %47 = vmatpush1.xpose.msra.mxu0 0.0
    %48 = vmatprep.subr.mxu0 0.0
    %49 = vmatpush1.xpose.msra.mxu0 0.0
    %50 = vmatprep.subr.mxu0 0.0
    %51 = vmatpush1.xpose.msra.mxu0 0.0
    %52 = vmatprep.subr.mxu0 0.0
    %53 = vmatpush1.xpose.msra.mxu0 0.0
    %54 = vmatprep.subr.mxu0 0.0
    %55 = vmatpush1.xpose.msra.mxu0 0.0
    %56 = vmatprep.subr.mxu0 0.0
    %57 = vmatpush1.xpose.msra.mxu0 0.0
    %58 = vmatprep.subr.mxu0 0.0
    %59 = vmatpush1.xpose.msra.mxu0 0.0
    %60 = vmatprep.subr.mxu0 0.0
    %61 = vmatpush1.xpose.msra.mxu0 0.0
    %62 = vmatprep.subr.mxu0 0.0
    %63 = vmatpush1.xpose.msra.mxu0 0.0
    %64 = vmatprep.subr.mxu0 0.0
    %65 = vmatpush1.xpose.msra.mxu0 0.0
    %66 = vmatprep.subr.mxu0 0.0
    %67 = vmatpush1.xpose.msra.mxu0 0.0
    %68 = vmatprep.subr.mxu0 0.0
    %69 = vmatpush1.xpose.msra.mxu0 0.0
    %70 = vmatprep.subr.mxu0 0.0
    %71 = vmatpush1.xpose.msra.mxu0 0.0
    %72 = vmatprep.subr.mxu0 0.0
    %73 = vmatpush1.xpose.msra.mxu0 0.0
    %74 = vmatprep.subr.mxu0 0.0
    %75 = vmatpush1.xpose.msra.mxu0 0.0
    %76 = vmatprep.subr.mxu0 0.0
    %77 = vmatpush1.xpose.msra.mxu0 0.0
    %78 = vmatprep.subr.mxu0 0.0
    %79 = vmatpush1.xpose.msra.mxu0 0.0
    %80 = vmatprep.subr.mxu0 0.0
    %81 = vmatpush1.xpose.msra.mxu0 0.0
    %82 = vmatprep.subr.mxu0 0.0
    %83 = vmatpush1.xpose.msra.mxu0 0.0
    %84 = vmatprep.subr.mxu0 0.0
    %85 = vmatpush1.xpose.msra.mxu0 0.0
    %86 = vmatprep.subr.mxu0 0.0
    %87 = vmatpush1.xpose.msra.mxu0 0.0
    %88 = vmatprep.subr.mxu0 0.0
    %89 = vmatpush1.xpose.msra.mxu0 0.0
    %90 = vmatprep.subr.mxu0 0.0
    %91 = vmatpush1.xpose.msra.mxu0 0.0
    %92 = vmatprep.subr.mxu0 0.0
    %93 = vmatpush1.xpose.msra.mxu0 0.0
    %94 = vmatprep.subr.mxu0 0.0
    %95 = vmatpush1.xpose.msra.mxu0 0.0
    %96 = vmatprep.subr.mxu0 0.0
    %97 = vmatpush1.xpose.msra.mxu0 0.0
    %98 = vmatprep.subr.mxu0 0.0
    %99 = vmatpush1.xpose.msra.mxu0 0.0
    %100 = vmatprep.subr.mxu0 0.0
    %101 = vmatpush1.xpose.msra.mxu0 0.0
    %102 = vmatprep.subr.mxu0 0.0
    %103 = vmatpush1.xpose.msra.mxu0 0.0
    %104 = vmatprep.subr.mxu0 0.0
    %105 = vmatpush1.xpose.msra.mxu0 0.0
    %106 = vmatprep.subr.mxu0 0.0
    %107 = vmatpush1.xpose.msra.mxu0 0.0
    %108 = vmatprep.mubr.f32.mxu0 0.0
    %109 = vmatmul.mubr.f32.gmra.mrb[0].mxu0 %v42
    %v110 = vpop.f32.mrb[0].mxu0
    %v111 = vadd.f32 0.0, %v110
    %v112 = vpop.f32.mrb[0].mxu0
    %113 = vdwg.mxu0
    %v114 = vmul.f32 %v111, 2.0
    %s115 = smul.u32 0, 8
    %v116 = vlaneseq
    %v117 = vshrl.u32 %v116, 7
    %v118 = vstv %s115
    %v119 = vadd.s32 %v118, %v117
    %s120 = smul.u32 0, 8
    %v121 = vlaneseq
    %v122 = vand.u32 %v121, 127
    %v123 = vstv %s120
    %v124 = vadd.s32 %v123, %v122
    %vm125 = vcmp.eq.s32.totalorder %v119, %v124
    %v126 = vsel %vm125, 0.0, %v114
    %v127 = vmul.f32 %v126, 1.442695
    %v128 = vpow.pop %v127
    %vm129 = vcmp.lt.s32.totalorder %v124, 4
    %v130 = vsel %vm129, %v128, 0.0
    %v131 = vld [vmem:[#allocation2] sm:$0xff]
    %vm132 = vcmask 64512
    %v133 = vsel %vm132, %v130, 0.0
    %134 = vadd.xlane.f32.xlu0 %v133
    %v135 = vpop.xlane.xlu0 %134
    %v136 = vadd.f32 %v131, %v135
    %vm137 = vcmask 7168
    %138 = vst.msk [vmem:[#allocation2] sm:$0xff] %vm137, %v136
    %vm139 = vcmp.lt.s32.totalorder %v119, 2
    %v140 = vadd.s32 %v119, 2
    %v141 = vsub.s32 %v119, 2
    %v142 = vsel %vm139, %v140, %v141
    %vm143 = vcmp.eq.s32.totalorder %v124, %v142
    %vm144 = vmand %vm143, %vm129
    %v145 = vld [vmem:[#allocation3] sm:$0xff]
    %v146 = vsel %vm144, %v114, 0.0
    %v147 = vsel %vm132, %v146, 0.0
    %148 = vadd.xlane.f32.xlu0 %v147
    %v149 = vpop.xlane.xlu0 %148
    %v150 = vadd.f32 %v145, %v149
    %151 = vst.msk [vmem:[#allocation3] sm:$0xff] %vm137, %v150
    // Predicated region
    $region22: #{tpu_custom_call.1} parent=1 // pred_check
      %p152 = pneg %p35
    $region23: #{tpu_custom_call.1} parent=1 // pred_check_branch
      %154 = sbr.rel (%p152) target = $region25
    $region24: #{tpu_custom_call.1} parent=1 // pred_region
      %v155 = vld [vmem:[#allocation2] sm:$0xff]
      %v156 = vlog2.pop %v155
      %v157 = vmul.f32 %v156, 0.6931472
      %v158 = vld [vmem:[#allocation3] sm:$0xff]
      %v159 = vsub.f32 %v157, %v158
      %160 = vst.msk [vmem:[%s2] sm:$0xff] %vm137, %v159
    $region25: #{tpu_custom_call.1} parent=1 // pred_fallthru
      _
    // Predicated region
    $region26: #{tpu_custom_call.1} parent=1 // pred_check
      _
    $region27: #{tpu_custom_call.1} parent=1 // pred_check_branch
      %162 = sbr.rel (0) target = $region29
    $region28: #{tpu_custom_call.1} parent=1 // pred_region
      _
    $region29: #{tpu_custom_call.1} parent=1 // pred_fallthru
      _
    // Predicated region
    $region30: #{tpu_custom_call.1} parent=1 // pred_check
      _
    $region31: #{tpu_custom_call.1} parent=1 // pred_check_branch
      %164 = sbr.rel (0) target = $region33
    $region32: #{tpu_custom_call.1} parent=1 // pred_region
      _
    $region33: #{tpu_custom_call.1} parent=1 // pred_fallthru
      _
    %165 = vsyncpa [#allocation5], 1
    %166 = vsyncpa [#allocation7], 1

</llo_original>
